<compile_context>
chip_gen: v6e
topology: v6e:2x2x1
jax: 0.10.0
libtpu: 0.0.40
codegen_flags: <defaults>
</compile_context>

<pallas_src>
import functools

import jax
import jax.numpy as jnp
from jax.experimental import pallas as pl
from jax.experimental.pallas import tpu as pltpu

_LANE = 128
_SUBLANE = 8


def _round_up(n, m):
    return ((n + m - 1) // m) * m


def dqn_kernel(x_ref, w1_ref, w2_ref, b2_ref, w3_ref, b3_ref, o_ref):
    """Fused 3-layer MLP, ReLU after every layer, all matmuls on the MXU.

    Layer-1 bias is pre-folded into w1 (x carries a ones column), so layer 1
    is a pure matmul. Bias adds and ReLUs run in f32 on the VPU.
    """
    x = x_ref[...]

    # Layer 1: [tb, k_pad] @ [k_pad, 128]  (bias folded into w1)
    h1 = jnp.dot(x, w1_ref[...], preferred_element_type=jnp.float32)
    h1 = jnp.maximum(h1, 0.0)

    # Layer 2: [tb, 128] @ [128, 128] + b2
    h2 = jnp.dot(h1.astype(w2_ref.dtype), w2_ref[...],
                 preferred_element_type=jnp.float32) + b2_ref[...]
    h2 = jnp.maximum(h2, 0.0)

    # Layer 3 (lane-dense padded to 128 cols): [tb, 128] @ [128, 128] + b3
    h3 = jnp.dot(h2.astype(w3_ref.dtype), w3_ref[...],
                 preferred_element_type=jnp.float32) + b3_ref[...]
    h3 = jnp.maximum(h3, 0.0)

    o_ref[...] = h3.astype(o_ref.dtype)


def dqn_forward(x, params, *, batch_tile=None, compute_dtype=jnp.float32):
    """x: [B, n_obs] float32. params: dict of pre-transposed weights/biases.

    Returns [B, n_actions] float32 Q-values (with the module's final ReLU).
    """
    B, n_obs = x.shape
    w1, b1 = params["w1"], params["b1"]   # [n_obs,128], [1,128]
    w2, b2 = params["w2"], params["b2"]   # [128,128],   [1,128]
    w3, b3 = params["w3"], params["b3"]   # [128,n_act], [1,n_act]
    hidden = w2.shape[0]
    n_act = w3.shape[1]

    # ---- Layer-1 K padding + bias folding (ones column in x). ----
    k_pad = _round_up(max(n_obs + 1, _SUBLANE), _SUBLANE)
    w1_pad = jnp.zeros((k_pad, hidden), compute_dtype)
    w1_pad = w1_pad.at[:n_obs, :].set(w1.astype(compute_dtype))
    w1_pad = w1_pad.at[n_obs, :].set(b1.reshape(hidden).astype(compute_dtype))

    # ---- Lane-dense output: pad layer-3 to a full 128-lane width. ----
    n_act_pad = _round_up(n_act, _LANE)
    w3_pad = jnp.zeros((hidden, n_act_pad), compute_dtype)
    w3_pad = w3_pad.at[:, :n_act].set(w3.astype(compute_dtype))
    b3_pad = jnp.zeros((1, n_act_pad), jnp.float32)
    b3_pad = b3_pad.at[:, :n_act].set(b3.astype(jnp.float32))

    w2c = w2.astype(compute_dtype)
    b2f = b2.astype(jnp.float32)

    # ---- Batch tiling: big tiles to amortize per-step overhead, capped at 512
    # so the [tb,128] f32 intermediates fit in the register file (no spill).
    if batch_tile is None:
        tb = min(512, _round_up(B, _SUBLANE))
    else:
        tb = batch_tile
    B_pad = _round_up(B, tb)

    x_pad = jnp.zeros((B_pad, k_pad), compute_dtype)
    x_pad = x_pad.at[:B, :n_obs].set(x.astype(compute_dtype))
    x_pad = x_pad.at[:, n_obs].set(jnp.asarray(1.0, compute_dtype))  # bias column

    grid = (B_pad // tb,)

    out_pad = pl.pallas_call(
        dqn_kernel,
        out_shape=jax.ShapeDtypeStruct((B_pad, n_act_pad), jnp.float32),
        grid_spec=pl.GridSpec(
            grid=grid,
            in_specs=[
                pl.BlockSpec((tb, k_pad), lambda i: (i, 0)),        # x tile
                pl.BlockSpec((k_pad, hidden), lambda i: (0, 0)),    # w1 (+b1), resident
                pl.BlockSpec((hidden, hidden), lambda i: (0, 0)),   # w2, resident
                pl.BlockSpec((1, hidden), lambda i: (0, 0)),        # b2
                pl.BlockSpec((hidden, n_act_pad), lambda i: (0, 0)),# w3 padded
                pl.BlockSpec((1, n_act_pad), lambda i: (0, 0)),     # b3 padded
            ],
            out_specs=pl.BlockSpec((tb, n_act_pad), lambda i: (i, 0)),
        ),
        compiler_params=pltpu.CompilerParams(
            dimension_semantics=("parallel",),  # shards batch axis across TCs on v7x
        ),
    )(x_pad, w1_pad, w2c, b2f, w3_pad, b3_pad)

    return out_pad[:B, :n_act]


def init_params(key, n_observations, n_actions, hidden=128):
    """Deterministic synthetic init (PyTorch-Linear-like uniform bounds).

    Weights are stored transposed relative to torch: [in_features, out_features].
    """
    ks = jax.random.split(key, 6)

    def lin(kw, kb, fan_in, fan_out):
        bound = 1.0 / jnp.sqrt(float(fan_in))
        w = jax.random.uniform(kw, (fan_in, fan_out), jnp.float32, -bound, bound)
        b = jax.random.uniform(kb, (1, fan_out), jnp.float32, -bound, bound)
        return w, b

    w1, b1 = lin(ks[0], ks[1], n_observations, hidden)
    w2, b2 = lin(ks[2], ks[3], hidden, hidden)
    w3, b3 = lin(ks[4], ks[5], hidden, n_actions)
    return {"w1": w1, "b1": b1, "w2": w2, "b2": b2, "w3": w3, "b3": b3}


def dqn_reference(x, p):
    """Pure-JAX reference of the same forward pass (matches the PyTorch spec)."""
    h = jnp.maximum(x @ p["w1"] + p["b1"], 0.0)
    h = jnp.maximum(h @ p["w2"] + p["b2"], 0.0)
    h = jnp.maximum(h @ p["w3"] + p["b3"], 0.0)
    return h


if __name__ == "__main__":
    # CartPole-v1: n_observations = 4, n_actions = 2
    n_observations, n_actions, hidden = 4, 2, 128

    key = jax.random.PRNGKey(0)
    kx, kp, kx2 = jax.random.split(key, 3)
    params = init_params(kp, n_observations, n_actions, hidden)

    # Small RL-step-sized batch (single grid step, overhead-bound regime).
    batch = 8
    x = jax.random.normal(kx, (batch, n_observations), jnp.float32)
    out = jax.block_until_ready(dqn_forward(x, params))
    ref = dqn_reference(x, params)
    assert out.shape == (batch, n_actions), out.shape
    assert jnp.allclose(out, ref, atol=1e-5, rtol=1e-5), "mismatch vs reference (B=8)"

    # Larger batch: exercises batch padding, multi-step grid, and TC sharding.
    batch2 = 1000  # non-multiple of the 512 tile -> padded to 1024, grid=(2,)
    x2 = jax.random.normal(kx2, (batch2, n_observations), jnp.float32)
    out2 = jax.block_until_ready(dqn_forward(x2, params))
    ref2 = dqn_reference(x2, params)
    assert out2.shape == (batch2, n_actions), out2.shape
    assert jnp.allclose(out2, ref2, atol=1e-5, rtol=1e-5), "mismatch vs reference (B=1000)"

    print("KERNEL_OK")
</pallas_src>

<mosaic_0001>
module attributes {stable_mosaic.version = 11 : i64} {
  func.func @dqn_kernel(%arg0: i32, %arg1: memref<8x8xf32, #tpu.memory_space<vmem>>, %arg2: memref<8x128xf32, #tpu.memory_space<vmem>>, %arg3: memref<128x128xf32, #tpu.memory_space<vmem>>, %arg4: memref<1x128xf32, #tpu.memory_space<vmem>>, %arg5: memref<128x128xf32, #tpu.memory_space<vmem>>, %arg6: memref<1x128xf32, #tpu.memory_space<vmem>>, %arg7: memref<8x128xf32, #tpu.memory_space<vmem>>) attributes {dimension_semantics = [#tpu.dimension_semantics<parallel>], iteration_bounds = array<i64: 1>, scalar_prefetch = 0 : i64, scratch_operands = 0 : i64, tpu.core_type = #tpu.core_type<tc>, window_params = [{transform_indices = @transform_0, window_bounds = array<i64: 8, 8>}, {pipeline_mode = #tpu.pipeline_mode<synchronous>, transform_indices = @transform_1, window_bounds = array<i64: 8, 128>}, {pipeline_mode = #tpu.pipeline_mode<synchronous>, transform_indices = @transform_2, window_bounds = array<i64: 128, 128>}, {pipeline_mode = #tpu.pipeline_mode<synchronous>, transform_indices = @transform_3, window_bounds = array<i64: 1, 128>}, {pipeline_mode = #tpu.pipeline_mode<synchronous>, transform_indices = @transform_4, window_bounds = array<i64: 128, 128>}, {pipeline_mode = #tpu.pipeline_mode<synchronous>, transform_indices = @transform_5, window_bounds = array<i64: 1, 128>}, {transform_indices = @transform_6, window_bounds = array<i64: 8, 128>}]} {
    %c0 = arith.constant 0 : index
    %c0_0 = arith.constant 0 : index
    %0 = vector.load %arg1[%c0, %c0_0] : memref<8x8xf32, #tpu.memory_space<vmem>>, vector<8x8xf32>
    %c0_1 = arith.constant 0 : index
    %c0_2 = arith.constant 0 : index
    %1 = vector.load %arg2[%c0_1, %c0_2] : memref<8x128xf32, #tpu.memory_space<vmem>>, vector<8x128xf32>
    %cst = arith.constant dense<0.000000e+00> : vector<8x128xf32>
    %2 = tpu.matmul %0, %1, %cst {dimension_numbers = #tpu.dot_dimension_numbers<[1], [0], [0], [1], [0, 0, 1, 1], [], []>} : vector<8x8xf32>, vector<8x128xf32>, vector<8x128xf32> -> vector<8x128xf32>
    %cst_3 = arith.constant 0.000000e+00 : f32
    %3 = vector.broadcast %cst_3 : f32 to vector<8x128xf32>
    %4 = arith.maximumf %2, %3 : vector<8x128xf32>
    %c0_4 = arith.constant 0 : index
    %c0_5 = arith.constant 0 : index
    %5 = vector.load %arg3[%c0_4, %c0_5] : memref<128x128xf32, #tpu.memory_space<vmem>>, vector<128x128xf32>
    %cst_6 = arith.constant dense<0.000000e+00> : vector<8x128xf32>
    %6 = tpu.matmul %4, %5, %cst_6 {dimension_numbers = #tpu.dot_dimension_numbers<[1], [0], [0], [1], [0, 0, 1, 1], [], []>} : vector<8x128xf32>, vector<128x128xf32>, vector<8x128xf32> -> vector<8x128xf32>
    %c0_7 = arith.constant 0 : index
    %c0_8 = arith.constant 0 : index
    %7 = vector.load %arg4[%c0_7, %c0_8] : memref<1x128xf32, #tpu.memory_space<vmem>>, vector<1x128xf32>
    %8 = vector.broadcast %7 : vector<1x128xf32> to vector<8x128xf32>
    %9 = arith.addf %6, %8 : vector<8x128xf32>
    %cst_9 = arith.constant 0.000000e+00 : f32
    %10 = vector.broadcast %cst_9 : f32 to vector<8x128xf32>
    %11 = arith.maximumf %9, %10 : vector<8x128xf32>
    %c0_10 = arith.constant 0 : index
    %c0_11 = arith.constant 0 : index
    %12 = vector.load %arg5[%c0_10, %c0_11] : memref<128x128xf32, #tpu.memory_space<vmem>>, vector<128x128xf32>
    %cst_12 = arith.constant dense<0.000000e+00> : vector<8x128xf32>
    %13 = tpu.matmul %11, %12, %cst_12 {dimension_numbers = #tpu.dot_dimension_numbers<[1], [0], [0], [1], [0, 0, 1, 1], [], []>} : vector<8x128xf32>, vector<128x128xf32>, vector<8x128xf32> -> vector<8x128xf32>
    %c0_13 = arith.constant 0 : index
    %c0_14 = arith.constant 0 : index
    %14 = vector.load %arg6[%c0_13, %c0_14] : memref<1x128xf32, #tpu.memory_space<vmem>>, vector<1x128xf32>
    %15 = vector.broadcast %14 : vector<1x128xf32> to vector<8x128xf32>
    %16 = arith.addf %13, %15 : vector<8x128xf32>
    %cst_15 = arith.constant 0.000000e+00 : f32
    %17 = vector.broadcast %cst_15 : f32 to vector<8x128xf32>
    %18 = arith.maximumf %16, %17 : vector<8x128xf32>
    %c0_16 = arith.constant 0 : index
    %c0_17 = arith.constant 0 : index
    %19 = vector.load %arg7[%c0_16, %c0_17] : memref<8x128xf32, #tpu.memory_space<vmem>>, vector<8x128xf32>
    tpu.vector_store %arg7[%c0_16, %c0_17], %18 {strides = array<i32>} : memref<8x128xf32, #tpu.memory_space<vmem>>, vector<8x128xf32>,
    return
  }
  func.func @transform_0(%arg0: i32) -> (i32, i32) {
    %c0_i32 = arith.constant 0 : i32
    %c0_i32_0 = arith.constant 0 : i32
    return %arg0, %c0_i32 : i32, i32
  }
  func.func @transform_1(%arg0: i32) -> (i32, i32) {
    %c0_i32 = arith.constant 0 : i32
    %c0_i32_0 = arith.constant 0 : i32
    %c0_i32_1 = arith.constant 0 : i32
    return %c0_i32, %c0_i32_0 : i32, i32
  }
  func.func @transform_2(%arg0: i32) -> (i32, i32) {
    %c0_i32 = arith.constant 0 : i32
    %c0_i32_0 = arith.constant 0 : i32
    %c0_i32_1 = arith.constant 0 : i32
    return %c0_i32, %c0_i32_0 : i32, i32
  }
  func.func @transform_3(%arg0: i32) -> (i32, i32) {
    %c0_i32 = arith.constant 0 : i32
    %c0_i32_0 = arith.constant 0 : i32
    %c0_i32_1 = arith.constant 0 : i32
    return %c0_i32, %c0_i32_0 : i32, i32
  }
  func.func @transform_4(%arg0: i32) -> (i32, i32) {
    %c0_i32 = arith.constant 0 : i32
    %c0_i32_0 = arith.constant 0 : i32
    %c0_i32_1 = arith.constant 0 : i32
    return %c0_i32, %c0_i32_0 : i32, i32
  }
  func.func @transform_5(%arg0: i32) -> (i32, i32) {
    %c0_i32 = arith.constant 0 : i32
    %c0_i32_0 = arith.constant 0 : i32
    %c0_i32_1 = arith.constant 0 : i32
    return %c0_i32, %c0_i32_0 : i32, i32
  }
  func.func @transform_6(%arg0: i32) -> (i32, i32) {
    %c0_i32 = arith.constant 0 : i32
    %c0_i32_0 = arith.constant 0 : i32
    return %arg0, %c0_i32 : i32, i32
  }
}

</mosaic_0001>

<llo_original>
// kernel: tpu_custom_call.1
$region0: #{tpu_custom_call.1}
  #allocation0 [shape = 'u32[]', space=smem, size = 0x4, offset = 0x4, fixed_abs, tag = 'smem constant byte address 0x4 - core index']
  #allocation1 [shape = 'u32[144,128]{1,0:T(1,128)}', space=vmem, size = 0x12000, scoped, tag = 'internal scratch']
  %s0 = inlined_call_operand.hbm [shape: f32[8,8], index: 0, kind: input, shape index: {}]
  %s1 = inlined_call_operand.hbm [shape: f32[8,128], index: 1, kind: input, shape index: {}]
  %s2 = inlined_call_operand.hbm [shape: f32[128,128], index: 2, kind: input, shape index: {}]
  %s3 = inlined_call_operand.vmem [shape: f32[1,128], index: 3, kind: input, shape index: {}]
  %s4 = inlined_call_operand.hbm [shape: f32[128,128], index: 4, kind: input, shape index: {}]
  %s5 = inlined_call_operand.vmem [shape: f32[1,128], index: 5, kind: input, shape index: {}]
  %s6 = inlined_call_operand.hbm [shape: f32[8,128], index: 6, kind: output, shape index: {}]
  %s7 = sld [smem:[#allocation0]]
  $region50: #{tpu_custom_call.1} parent=0
    _
  %s9 = ssub.s32 1, %s7
  %s10 = scalar_select 0, %s9, %s7
  $region1: #{tpu_custom_call.1} parent=0
    #allocation2 [shape = 'u8[4096]{0}', space=vmem, size = 0x1000, scoped, tag = 'input window, operand 0, single buffered']
    #allocation3 [shape = 's32[1]{0}', space=sflag, size = 0x4, scoped, tag = 'scoped memory for tpu_custom_call.1']
    #allocation4 [shape = 's32[1]{0}', space=sflag, size = 0x4, scoped, tag = 'scoped memory for tpu_custom_call.1']
    #allocation5 [shape = 'u8[4096]{0}', space=vmem, size = 0x1000, scoped, tag = 'input window, operand 1, single buffered']
    #allocation6 [shape = 's32[1]{0}', space=sflag, size = 0x4, scoped, tag = 'scoped memory for tpu_custom_call.1']
    #allocation7 [shape = 'u8[65536]{0}', space=vmem, size = 0x10000, scoped, tag = 'input window, operand 2, single buffered']
    #allocation8 [shape = 'u8[65536]{0}', space=vmem, size = 0x10000, scoped, tag = 'input window, operand 4, single buffered']
    #allocation9 [shape = 's32[1]{0}', space=sflag, size = 0x4, scoped, tag = 'scoped memory for tpu_custom_call.1']
    #allocation10 [shape = 'u8[4096]{0}', space=vmem, size = 0x1000, scoped, tag = 'output window, operand 0, single buffered']
    %11 = vsyncpa [#allocation3], 0
    %12 = vsyncpa [#allocation6], 0
    %13 = vsyncpa [#allocation9], 0
    %14 = vsyncpa [#allocation4], 0
    // Predicated region
    $region2: #{tpu_custom_call.1} parent=1 // pred_check
      _
    $region3: #{tpu_custom_call.1} parent=1 // pred_check_branch
      %16 = sbr.rel (0) target = $region5
    $region4: #{tpu_custom_call.1} parent=1 // pred_region
      %s18 = ssub.s32 128, 128
      %19 = vsyncadd [#allocation3], %s18
      %s21 = sshll.u32 [#allocation2], 4
      %s22 = int_to_ptr.vmem [resolvable:$true] %s21
      %24 = dma.hbm_to_vmem [thread:$0]  %s0, 128, %s22, [#allocation3]
    $region5: #{tpu_custom_call.1} parent=1 // pred_fallthru
      _
    // Predicated region
    $region6: #{tpu_custom_call.1} parent=1 // pred_check
      _
    $region7: #{tpu_custom_call.1} parent=1 // pred_check_branch
      %26 = sbr.rel (0) target = $region9
    $region8: #{tpu_custom_call.1} parent=1 // pred_region
      %s28 = ssub.s32 128, 128
      %29 = vsyncadd [#allocation6], %s28
      %s31 = sshll.u32 [#allocation5], 4
      %s32 = int_to_ptr.vmem [resolvable:$true] %s31
      %34 = dma.hbm_to_vmem [thread:$0]  %s1, 128, %s32, [#allocation6]
    $region9: #{tpu_custom_call.1} parent=1 // pred_fallthru
      _
    // Predicated region
    $region10: #{tpu_custom_call.1} parent=1 // pred_check
      _
    $region11: #{tpu_custom_call.1} parent=1 // pred_check_branch
      %36 = sbr.rel (0) target = $region13
    $region12: #{tpu_custom_call.1} parent=1 // pred_region
      %s38 = ssub.s32 2048, 2048
      %39 = vsyncadd [#allocation6], %s38
      %s40 = sshll.u32 [#allocation7], 4
      %s41 = int_to_ptr.vmem [resolvable:$true] %s40
      %46 = dma.hbm_to_vmem [thread:$0]  %s2, 2048, %s41, [#allocation6], 128, 128, 8
    $region13: #{tpu_custom_call.1} parent=1 // pred_fallthru
      _
    // Predicated region
    $region14: #{tpu_custom_call.1} parent=1 // pred_check
      _
    $region15: #{tpu_custom_call.1} parent=1 // pred_check_branch
      %48 = sbr.rel (0) target = $region17
    $region16: #{tpu_custom_call.1} parent=1 // pred_region
      _
    $region17: #{tpu_custom_call.1} parent=1 // pred_fallthru
      _
    // Predicated region
    $region18: #{tpu_custom_call.1} parent=1 // pred_check
      _
    $region19: #{tpu_custom_call.1} parent=1 // pred_check_branch
      %50 = sbr.rel (0) target = $region21
    $region20: #{tpu_custom_call.1} parent=1 // pred_region
      %s52 = ssub.s32 2048, 2048
      %53 = vsyncadd [#allocation9], %s52
      %s54 = sshll.u32 [#allocation8], 4
      %s55 = int_to_ptr.vmem [resolvable:$true] %s54
      %60 = dma.hbm_to_vmem [thread:$0]  %s4, 2048, %s55, [#allocation9], 128, 128, 8
    $region21: #{tpu_custom_call.1} parent=1 // pred_fallthru
      _
    // Predicated region
    $region22: #{tpu_custom_call.1} parent=1 // pred_check
      _
    $region23: #{tpu_custom_call.1} parent=1 // pred_check_branch
      %62 = sbr.rel (0) target = $region25
    $region24: #{tpu_custom_call.1} parent=1 // pred_region
      _
    $region25: #{tpu_custom_call.1} parent=1 // pred_fallthru
      _
    // Predicated region
    $region26: #{tpu_custom_call.1} parent=1 // pred_check
      _
    $region27: #{tpu_custom_call.1} parent=1 // pred_check_branch
      %64 = sbr.rel (0) target = $region29
    $region28: #{tpu_custom_call.1} parent=1 // pred_region
      %65 = dma.done [#allocation3], 128
    $region29: #{tpu_custom_call.1} parent=1 // pred_fallthru
      _
    // Predicated region
    $region30: #{tpu_custom_call.1} parent=1 // pred_check
      _
    $region31: #{tpu_custom_call.1} parent=1 // pred_check_branch
      %67 = sbr.rel (0) target = $region33
    $region32: #{tpu_custom_call.1} parent=1 // pred_region
      %68 = dma.done [#allocation6], 128
    $region33: #{tpu_custom_call.1} parent=1 // pred_fallthru
      _
    // Predicated region
    $region34: #{tpu_custom_call.1} parent=1 // pred_check
      _
    $region35: #{tpu_custom_call.1} parent=1 // pred_check_branch
      %70 = sbr.rel (0) target = $region37
    $region36: #{tpu_custom_call.1} parent=1 // pred_region
      %71 = dma.done [#allocation6], 2048
    $region37: #{tpu_custom_call.1} parent=1 // pred_fallthru
      _
    // Predicated region
    $region38: #{tpu_custom_call.1} parent=1 // pred_check
      _
    $region39: #{tpu_custom_call.1} parent=1 // pred_check_branch
      %73 = sbr.rel (0) target = $region41
    $region40: #{tpu_custom_call.1} parent=1 // pred_region
      %74 = dma.done [#allocation9], 2048
    $region41: #{tpu_custom_call.1} parent=1 // pred_fallthru
      _
    %v75 = vld [vmem:[#allocation2] sm:$0xff]
    %v76 = vld [vmem:[#allocation5] sm:$0xff]
    %vm77 = vcmask 64512
    %v79 = vsel %vm77, %v75, 0
    %81 = vmatprep.subr.mxu0 0.0
    %82 = vmatpush1.msra.mxu0 0.0
    %83 = vmatprep.subr.mxu0 0.0
    %84 = vmatpush1.msra.mxu0 0.0
    %85 = vmatprep.subr.mxu0 0.0
    %86 = vmatpush1.msra.mxu0 0.0
    %87 = vmatprep.subr.mxu0 0.0
    %88 = vmatpush1.msra.mxu0 0.0
    %89 = vmatprep.subr.mxu0 0.0
    %90 = vmatpush1.msra.mxu0 0.0
    %91 = vmatprep.subr.mxu0 0.0
    %92 = vmatpush1.msra.mxu0 0.0
    %93 = vmatprep.subr.mxu0 0.0
    %94 = vmatpush1.msra.mxu0 0.0
    %95 = vmatprep.subr.mxu0 0.0
    %96 = vmatpush1.msra.mxu0 0.0
    %97 = vmatprep.subr.mxu0 0.0
    %98 = vmatpush1.msra.mxu0 0.0
    %99 = vmatprep.subr.mxu0 0.0
    %100 = vmatpush1.msra.mxu0 0.0
    %101 = vmatprep.subr.mxu0 0.0
    %102 = vmatpush1.msra.mxu0 0.0
    %103 = vmatprep.subr.mxu0 0.0
    %104 = vmatpush1.msra.mxu0 0.0
    %105 = vmatprep.subr.mxu0 0.0
    %106 = vmatpush1.msra.mxu0 0.0
    %107 = vmatprep.subr.mxu0 0.0
    %108 = vmatpush1.msra.mxu0 0.0
    %109 = vmatprep.subr.mxu0 0.0
    %110 = vmatpush1.msra.mxu0 0.0
    %111 = vmatprep.subr.mxu0 0.0
    %112 = vmatpush1.msra.mxu0 %v76
    %113 = vmatprep.subr.mxu0 0.0
    %114 = vmatpush2.msra.mxu0 0.0
    %115 = vmatprep.subr.mxu0 0.0
    %116 = vmatpush2.msra.mxu0 0.0
    %117 = vmatprep.subr.mxu0 0.0
    %118 = vmatpush2.msra.mxu0 0.0
    %119 = vmatprep.subr.mxu0 0.0
    %120 = vmatpush2.msra.mxu0 0.0
    %121 = vmatprep.subr.mxu0 0.0
    %122 = vmatpush2.msra.mxu0 0.0
    %123 = vmatprep.subr.mxu0 0.0
    %124 = vmatpush2.msra.mxu0 0.0
    %125 = vmatprep.subr.mxu0 0.0
    %126 = vmatpush2.msra.mxu0 0.0
    %127 = vmatprep.subr.mxu0 0.0
    %128 = vmatpush2.msra.mxu0 0.0
    %129 = vmatprep.subr.mxu0 0.0
    %130 = vmatpush2.msra.mxu0 0.0
    %131 = vmatprep.subr.mxu0 0.0
    %132 = vmatpush2.msra.mxu0 0.0
    %133 = vmatprep.subr.mxu0 0.0
    %134 = vmatpush2.msra.mxu0 0.0
    %135 = vmatprep.subr.mxu0 0.0
    %136 = vmatpush2.msra.mxu0 0.0
    %137 = vmatprep.subr.mxu0 0.0
    %138 = vmatpush2.msra.mxu0 0.0
    %139 = vmatprep.subr.mxu0 0.0
    %140 = vmatpush2.msra.mxu0 0.0
    %141 = vmatprep.subr.mxu0 0.0
    %142 = vmatpush2.msra.mxu0 0.0
    %143 = vmatprep.subr.mxu0 0.0
    %144 = vmatpush2.msra.mxu0 0.0
    %145 = vmatprep.mubr.f32.mxu0 0.0
    %146 = vmatmul.mubr.f32.gmra.mxu0 %v79
    %v147 = vpop.f32.mrf.mxu0
    %v148 = vadd.f32 0.0, %v147
    %v149 = vpop.f32.mrf.mxu0
    %150 = vdwg.mxu0
    %v151 = vmax.f32 %v148, 0.0
    %v152 = vld [vmem:[#allocation7] sm:$0xff]
    %v153 = vld [vmem:[#allocation7 + $0x8] sm:$0xff]
    %v154 = vld [vmem:[#allocation7 + $0x10] sm:$0xff]
    %v155 = vld [vmem:[#allocation7 + $0x18] sm:$0xff]
    %v156 = vld [vmem:[#allocation7 + $0x20] sm:$0xff]
    %v157 = vld [vmem:[#allocation7 + $0x28] sm:$0xff]
    %v158 = vld [vmem:[#allocation7 + $0x30] sm:$0xff]
    %v159 = vld [vmem:[#allocation7 + $0x38] sm:$0xff]
    %v160 = vld [vmem:[#allocation7 + $0x40] sm:$0xff]
    %v161 = vld [vmem:[#allocation7 + $0x48] sm:$0xff]
    %v162 = vld [vmem:[#allocation7 + $0x50] sm:$0xff]
    %v163 = vld [vmem:[#allocation7 + $0x58] sm:$0xff]
    %v164 = vld [vmem:[#allocation7 + $0x60] sm:$0xff]
    %v165 = vld [vmem:[#allocation7 + $0x68] sm:$0xff]
    %v166 = vld [vmem:[#allocation7 + $0x70] sm:$0xff]
    %v167 = vld [vmem:[#allocation7 + $0x78] sm:$0xff]
    %v168 = vld [vmem:[%s3] sm:$0x1]
    %v170 = vlaneseq
    %v171 = vshrl.u32 %v170, 7
    %v172 = vsub.s32 0, %v171
    %v173 = vrot.slane %v168, %v172
    %175 = vmatprep.subr.mxu0 0.0
    %176 = vmatpush1.msra.mxu0 %v167
    %177 = vmatprep.subr.mxu0 0.0
    %178 = vmatpush1.msra.mxu0 %v166
    %179 = vmatprep.subr.mxu0 0.0
    %180 = vmatpush1.msra.mxu0 %v165
    %181 = vmatprep.subr.mxu0 0.0
    %182 = vmatpush1.msra.mxu0 %v164
    %183 = vmatprep.subr.mxu0 0.0
    %184 = vmatpush1.msra.mxu0 %v163
    %185 = vmatprep.subr.mxu0 0.0
    %186 = vmatpush1.msra.mxu0 %v162
    %187 = vmatprep.subr.mxu0 0.0
    %188 = vmatpush1.msra.mxu0 %v161
    %189 = vmatprep.subr.mxu0 0.0
    %190 = vmatpush1.msra.mxu0 %v160
    %191 = vmatprep.subr.mxu0 0.0
    %192 = vmatpush1.msra.mxu0 %v159
    %193 = vmatprep.subr.mxu0 0.0
    %194 = vmatpush1.msra.mxu0 %v158
    %195 = vmatprep.subr.mxu0 0.0
    %196 = vmatpush1.msra.mxu0 %v157
    %197 = vmatprep.subr.mxu0 0.0
    %198 = vmatpush1.msra.mxu0 %v156
    %199 = vmatprep.subr.mxu0 0.0
    %200 = vmatpush1.msra.mxu0 %v155
    %201 = vmatprep.subr.mxu0 0.0
    %202 = vmatpush1.msra.mxu0 %v154
    %203 = vmatprep.subr.mxu0 0.0
    %204 = vmatpush1.msra.mxu0 %v153
    %205 = vmatprep.subr.mxu0 0.0
    %206 = vmatpush1.msra.mxu0 %v152
    %207 = vmatprep.subr.mxu0 0.0
    %208 = vmatpush2.msra.mxu0 0.0
    %209 = vmatprep.subr.mxu0 0.0
    %210 = vmatpush2.msra.mxu0 0.0
    %211 = vmatprep.subr.mxu0 0.0
    %212 = vmatpush2.msra.mxu0 0.0
    %213 = vmatprep.subr.mxu0 0.0
    %214 = vmatpush2.msra.mxu0 0.0
    %215 = vmatprep.subr.mxu0 0.0
    %216 = vmatpush2.msra.mxu0 0.0
    %217 = vmatprep.subr.mxu0 0.0
    %218 = vmatpush2.msra.mxu0 0.0
    %219 = vmatprep.subr.mxu0 0.0
    %220 = vmatpush2.msra.mxu0 0.0
    %221 = vmatprep.subr.mxu0 0.0
    %222 = vmatpush2.msra.mxu0 0.0
    %223 = vmatprep.subr.mxu0 0.0
    %224 = vmatpush2.msra.mxu0 0.0
    %225 = vmatprep.subr.mxu0 0.0
    %226 = vmatpush2.msra.mxu0 0.0
    %227 = vmatprep.subr.mxu0 0.0
    %228 = vmatpush2.msra.mxu0 0.0
    %229 = vmatprep.subr.mxu0 0.0
    %230 = vmatpush2.msra.mxu0 0.0
    %231 = vmatprep.subr.mxu0 0.0
    %232 = vmatpush2.msra.mxu0 0.0
    %233 = vmatprep.subr.mxu0 0.0
    %234 = vmatpush2.msra.mxu0 0.0
    %235 = vmatprep.subr.mxu0 0.0
    %236 = vmatpush2.msra.mxu0 0.0
    %237 = vmatprep.subr.mxu0 0.0
    %238 = vmatpush2.msra.mxu0 0.0
    %239 = vmatprep.mubr.f32.mxu0 0.0
    %240 = vmatmul.mubr.f32.gmra.mxu0 %v151
    %v241 = vpop.f32.mrf.mxu0
    %v242 = vadd.f32 %v173, %v241
    %v243 = vpop.f32.mrf.mxu0
    %244 = vdwg.mxu0
    %v245 = vmax.f32 %v242, 0.0
    %v246 = vld [vmem:[#allocation8] sm:$0xff]
    %v247 = vld [vmem:[#allocation8 + $0x8] sm:$0xff]
    %v248 = vld [vmem:[#allocation8 + $0x10] sm:$0xff]
    %v249 = vld [vmem:[#allocation8 + $0x18] sm:$0xff]
    %v250 = vld [vmem:[#allocation8 + $0x20] sm:$0xff]
    %v251 = vld [vmem:[#allocation8 + $0x28] sm:$0xff]
    %v252 = vld [vmem:[#allocation8 + $0x30] sm:$0xff]
    %v253 = vld [vmem:[#allocation8 + $0x38] sm:$0xff]
    %v254 = vld [vmem:[#allocation8 + $0x40] sm:$0xff]
    %v255 = vld [vmem:[#allocation8 + $0x48] sm:$0xff]
    %v256 = vld [vmem:[#allocation8 + $0x50] sm:$0xff]
    %v257 = vld [vmem:[#allocation8 + $0x58] sm:$0xff]
    %v258 = vld [vmem:[#allocation8 + $0x60] sm:$0xff]
    %v259 = vld [vmem:[#allocation8 + $0x68] sm:$0xff]
    %v260 = vld [vmem:[#allocation8 + $0x70] sm:$0xff]
    %v261 = vld [vmem:[#allocation8 + $0x78] sm:$0xff]
    %v262 = vld [vmem:[%s5] sm:$0x1]
    %v264 = vlaneseq
    %v265 = vshrl.u32 %v264, 7
    %v266 = vsub.s32 0, %v265
    %v267 = vrot.slane %v262, %v266
    %269 = vmatprep.subr.mxu0 0.0
    %270 = vmatpush1.msra.mxu0 %v261
    %271 = vmatprep.subr.mxu0 0.0
    %272 = vmatpush1.msra.mxu0 %v260
    %273 = vmatprep.subr.mxu0 0.0
    %274 = vmatpush1.msra.mxu0 %v259
    %275 = vmatprep.subr.mxu0 0.0
    %276 = vmatpush1.msra.mxu0 %v258
    %277 = vmatprep.subr.mxu0 0.0
    %278 = vmatpush1.msra.mxu0 %v257
    %279 = vmatprep.subr.mxu0 0.0
    %280 = vmatpush1.msra.mxu0 %v256
    %281 = vmatprep.subr.mxu0 0.0
    %282 = vmatpush1.msra.mxu0 %v255
    %283 = vmatprep.subr.mxu0 0.0
    %284 = vmatpush1.msra.mxu0 %v254
    %285 = vmatprep.subr.mxu0 0.0
    %286 = vmatpush1.msra.mxu0 %v253
    %287 = vmatprep.subr.mxu0 0.0
    %288 = vmatpush1.msra.mxu0 %v252
    %289 = vmatprep.subr.mxu0 0.0
    %290 = vmatpush1.msra.mxu0 %v251
    %291 = vmatprep.subr.mxu0 0.0
    %292 = vmatpush1.msra.mxu0 %v250
    %293 = vmatprep.subr.mxu0 0.0
    %294 = vmatpush1.msra.mxu0 %v249
    %295 = vmatprep.subr.mxu0 0.0
    %296 = vmatpush1.msra.mxu0 %v248
    %297 = vmatprep.subr.mxu0 0.0
    %298 = vmatpush1.msra.mxu0 %v247
    %299 = vmatprep.subr.mxu0 0.0
    %300 = vmatpush1.msra.mxu0 %v246
    %301 = vmatprep.subr.mxu0 0.0
    %302 = vmatpush2.msra.mxu0 0.0
    %303 = vmatprep.subr.mxu0 0.0
    %304 = vmatpush2.msra.mxu0 0.0
    %305 = vmatprep.subr.mxu0 0.0
    %306 = vmatpush2.msra.mxu0 0.0
    %307 = vmatprep.subr.mxu0 0.0
    %308 = vmatpush2.msra.mxu0 0.0
    %309 = vmatprep.subr.mxu0 0.0
    %310 = vmatpush2.msra.mxu0 0.0
    %311 = vmatprep.subr.mxu0 0.0
    %312 = vmatpush2.msra.mxu0 0.0
    %313 = vmatprep.subr.mxu0 0.0
    %314 = vmatpush2.msra.mxu0 0.0
    %315 = vmatprep.subr.mxu0 0.0
    %316 = vmatpush2.msra.mxu0 0.0
    %317 = vmatprep.subr.mxu0 0.0
    %318 = vmatpush2.msra.mxu0 0.0
    %319 = vmatprep.subr.mxu0 0.0
    %320 = vmatpush2.msra.mxu0 0.0
    %321 = vmatprep.subr.mxu0 0.0
    %322 = vmatpush2.msra.mxu0 0.0
    %323 = vmatprep.subr.mxu0 0.0
    %324 = vmatpush2.msra.mxu0 0.0
    %325 = vmatprep.subr.mxu0 0.0
    %326 = vmatpush2.msra.mxu0 0.0
    %327 = vmatprep.subr.mxu0 0.0
    %328 = vmatpush2.msra.mxu0 0.0
    %329 = vmatprep.subr.mxu0 0.0
    %330 = vmatpush2.msra.mxu0 0.0
    %331 = vmatprep.subr.mxu0 0.0
    %332 = vmatpush2.msra.mxu0 0.0
    %333 = vmatprep.mubr.f32.mxu0 0.0
    %334 = vmatmul.mubr.f32.gmra.mxu0 %v245
    %v335 = vpop.f32.mrf.mxu0
    %v336 = vadd.f32 %v267, %v335
    %v337 = vpop.f32.mrf.mxu0
    %338 = vdwg.mxu0
    %v339 = vmax.f32 %v336, 0.0
    %340 = vst [vmem:[#allocation10] sm:$0xff] %v339
    // Predicated region
    $region42: #{tpu_custom_call.1} parent=1 // pred_check
      _
    $region43: #{tpu_custom_call.1} parent=1 // pred_check_branch
      %342 = sbr.rel (0) target = $region45
    $region44: #{tpu_custom_call.1} parent=1 // pred_region
      %s344 = ssub.s32 128, 128
      %345 = vsyncadd [#allocation4], %s344
      %s347 = sshll.u32 [#allocation10], 4
      %s348 = int_to_ptr.vmem [resolvable:$true] %s347
      %350 = dma.vmem_to_hbm [thread:$0]  %s348, 128, %s6, [#allocation4]
    $region45: #{tpu_custom_call.1} parent=1 // pred_fallthru
      _
    // Predicated region
    $region46: #{tpu_custom_call.1} parent=1 // pred_check
      _
    $region47: #{tpu_custom_call.1} parent=1 // pred_check_branch
      %352 = sbr.rel (0) target = $region49
    $region48: #{tpu_custom_call.1} parent=1 // pred_region
      %353 = dma.done [#allocation4], 128
    $region49: #{tpu_custom_call.1} parent=1 // pred_fallthru
      _
    %354 = vsyncpa [#allocation3], 1
    %355 = vsyncpa [#allocation6], 1
    %356 = vsyncpa [#allocation9], 1
    %357 = vsyncpa [#allocation4], 1

</llo_original>
